<compile_context>
chip_gen: v5e
topology: v5e:2x2
jax: 0.10.0
libtpu: 0.0.40
codegen_flags: <defaults>
</compile_context>

<pallas_src>
import functools

import jax
import jax.numpy as jnp
from jax import lax
from jax.experimental import pallas as pl
from jax.experimental.pallas import tpu as pltpu


def _round_up(x, m):
    return ((x + m - 1) // m) * m


def _min_triplet_kernel(a_ref, pool_ref, o_ref, minp_ref, minn_ref, *,
                        n_valid, mp_valid, mn_valid, tn, tm,
                        mp_tiles, m_tiles):
    i = pl.program_id(0)   # anchor (N) tile      -- "parallel"
    j = pl.program_id(1)   # combined pool tile   -- "arbitrary" (reduction)

    @pl.when(j == 0)
    def _init():
        minp_ref[...] = jnp.full(minp_ref.shape, jnp.inf, jnp.float32)
        minn_ref[...] = jnp.full(minn_ref.shape, jnp.inf, jnp.float32)

    a = a_ref[...]          # (tn, d) native dtype (bf16 stays bf16 on MXU)
    r = pool_ref[...]       # (tm, d) native dtype

    a_f32 = a.astype(jnp.float32)
    r_f32 = r.astype(jnp.float32)
    a_norm = jnp.sum(a_f32 * a_f32, axis=1, keepdims=True)      # (tn, 1)
    r_norm = jnp.sum(r_f32 * r_f32, axis=1)[None, :]            # (1, tm)

    # Fold the -2 into the anchor tile once; contract dim 1 of both operands
    # so neither side needs an in-kernel transpose/relayout.
    a2 = a * jnp.asarray(-2.0, dtype=a.dtype)
    prod = lax.dot_general(
        a2, r,
        dimension_numbers=(((1,), (1,)), ((), ())),
        preferred_element_type=jnp.float32)                     # (tn, tm)

    dist = jnp.maximum(a_norm + r_norm + prod, 0.0)             # clamp(min=0)

    # Mask padded pool columns to +inf so they never win the row-min.
    is_pos = j < mp_tiles
    col = lax.broadcasted_iota(jnp.int32, (tn, tm), 1)
    col_start = jnp.where(is_pos, j, j - mp_tiles) * tm
    limit = jnp.where(is_pos, mp_valid, mn_valid)
    dist = jnp.where(col_start + col < limit, dist, jnp.inf)

    blk_min = jnp.min(dist, axis=1, keepdims=True)              # (tn, 1)

    @pl.when(is_pos)
    def _upd_pos():
        minp_ref[...] = jnp.minimum(minp_ref[...], blk_min)

    @pl.when(jnp.logical_not(is_pos))
    def _upd_neg():
        minn_ref[...] = jnp.minimum(minn_ref[...], blk_min)

    # Last pool step: reduce the running mins (masking padded anchor rows)
    # and emit this N-tile's partial (pos_sum - neg_sum) as one dense block.
    @pl.when(j == m_tiles - 1)
    def _finalize():
        row = lax.broadcasted_iota(jnp.int32, (tn, 1), 0) + i * tn
        rmask = row < n_valid
        pos_sum = jnp.sum(jnp.where(rmask, minp_ref[...], 0.0))
        neg_sum = jnp.sum(jnp.where(rmask, minn_ref[...], 0.0))
        o_ref[...] = jnp.broadcast_to(pos_sum - neg_sum, o_ref.shape)


def min_triplet_loss(anchor_points, positive_pool, negative_pool, alpha=1.0,
                     *, tn=256, tm=512):
    """Pallas TPU implementation of MinTripletLoss.forward."""
    N, d = anchor_points.shape
    Mp, dp = positive_pool.shape
    Mn, dn = negative_pool.shape
    assert d == dp == dn, "embedding dims must match"

    # Tile sizes: clamp defaults down for tiny inputs (keep sublane multiple
    # of 8 for anchor tiles, lane-dense multiple of 128 for pool tiles).
    TN = min(tn, _round_up(N, 8))
    TM = min(tm, _round_up(max(Mp, Mn), 128))

    N_pad = _round_up(N, TN)
    Mp_pad = _round_up(Mp, TM)
    Mn_pad = _round_up(Mn, TM)

    n_tiles = N_pad // TN
    mp_tiles = Mp_pad // TM
    mn_tiles = Mn_pad // TM
    m_tiles = mp_tiles + mn_tiles

    a = anchor_points
    if N_pad != N:
        a = jnp.pad(a, ((0, N_pad - N), (0, 0)))
    p = positive_pool
    if Mp_pad != Mp:
        p = jnp.pad(p, ((0, Mp_pad - Mp), (0, 0)))
    n = negative_pool
    if Mn_pad != Mn:
        n = jnp.pad(n, ((0, Mn_pad - Mn), (0, 0)))
    pool = jnp.concatenate([p, n], axis=0)          # (Mp_pad + Mn_pad, d)

    kernel = functools.partial(
        _min_triplet_kernel,
        n_valid=N, mp_valid=Mp, mn_valid=Mn,
        tn=TN, tm=TM, mp_tiles=mp_tiles, m_tiles=m_tiles)

    partials = pl.pallas_call(
        kernel,
        out_shape=jax.ShapeDtypeStruct((n_tiles, 8, 128), jnp.float32),
        grid_spec=pltpu.PrefetchScalarGridSpec(
            num_scalar_prefetch=0,
            grid=(n_tiles, m_tiles),
            in_specs=[
                pl.BlockSpec((TN, d), lambda i, j: (i, 0)),   # anchor tile
                pl.BlockSpec((TM, d), lambda i, j: (j, 0)),   # pool tile
            ],
            out_specs=pl.BlockSpec((1, 8, 128), lambda i, j: (i, 0, 0)),
            scratch_shapes=[
                pltpu.VMEM((TN, 1), jnp.float32),   # running pos row-min
                pltpu.VMEM((TN, 1), jnp.float32),   # running neg row-min
            ]),
        compiler_params=pltpu.CompilerParams(
            dimension_semantics=("parallel", "arbitrary")),
    )(a, pool)

    # Per-tile partial (pos_sum - neg_sum) -> global diff -> relu(. + alpha).
    diff = jnp.sum(partials[:, 0, 0])
    return jnp.maximum(diff + jnp.float32(alpha), 0.0)


def _reference_loss(anchor, pos, neg, alpha=1.0):
    """Pure-JAX reference mirroring the PyTorch module semantics."""
    def dist(x, y):
        xn = jnp.sum(x * x, axis=1)[:, None]
        yn = jnp.sum(y * y, axis=1)[None, :]
        return jnp.maximum(xn + yn - 2.0 * x @ y.T, 0.0)

    pd = dist(anchor, pos)
    nd = dist(anchor, neg)
    return jnp.maximum(jnp.min(pd, axis=1).sum()
                       - jnp.min(nd, axis=1).sum() + alpha, 0.0)


if __name__ == "__main__":
    key = jax.random.PRNGKey(0)
    k1, k2, k3, k4, k5, k6 = jax.random.split(key, 6)

    # Case 1: tiny demo shapes (single tile each).
    N, Mp, Mn, d = 8, 16, 16, 32
    anchor = jax.random.normal(k1, (N, d), dtype=jnp.float32)
    positive = jax.random.normal(k2, (Mp, d), dtype=jnp.float32)
    negative = jax.random.normal(k3, (Mn, d), dtype=jnp.float32)

    loss = jax.block_until_ready(
        min_triplet_loss(anchor, positive, negative, alpha=1.0))
    ref = _reference_loss(anchor, positive, negative, alpha=1.0)
    assert jnp.allclose(loss, ref, atol=1e-3, rtol=1e-4), (loss, ref)

    # Case 2: ragged shapes exercising N-tiling, pool padding and masking.
    N2, Mp2, Mn2, d2 = 300, 200, 137, 48
    anchor2 = jax.random.normal(k4, (N2, d2), dtype=jnp.float32)
    positive2 = jax.random.normal(k5, (Mp2, d2), dtype=jnp.float32) + 4.0
    negative2 = jax.random.normal(k6, (Mn2, d2), dtype=jnp.float32)

    loss2 = jax.block_until_ready(
        min_triplet_loss(anchor2, positive2, negative2, alpha=1.0))
    ref2 = _reference_loss(anchor2, positive2, negative2, alpha=1.0)
    assert jnp.allclose(loss2, ref2, atol=1.0, rtol=1e-3), (loss2, ref2)

    print("KERNEL_OK")
</pallas_src>

<mosaic_0001>
module attributes {stable_mosaic.version = 11 : i64} {
  func.func @_min_triplet_kernel(%arg0: i32, %arg1: i32, %arg2: memref<8x32xf32, #tpu.memory_space<vmem>>, %arg3: memref<128x32xf32, #tpu.memory_space<vmem>>, %arg4: memref<1x8x128xf32, #tpu.memory_space<vmem>>, %arg5: memref<8x1xf32, #tpu.memory_space<vmem>>, %arg6: memref<8x1xf32, #tpu.memory_space<vmem>>) attributes {dimension_semantics = [#tpu.dimension_semantics<parallel>, #tpu.dimension_semantics<arbitrary>], iteration_bounds = array<i64: 1, 2>, scalar_prefetch = 0 : i64, scratch_operands = 2 : i64, tpu.core_type = #tpu.core_type<tc>, window_params = [{transform_indices = @transform_0, window_bounds = array<i64: 8, 32>}, {transform_indices = @transform_1, window_bounds = array<i64: 128, 32>}, {transform_indices = @transform_2, window_bounds = array<i64: 1, 8, 128>}]} {
    %c0_i32 = arith.constant 0 : i32
    %0 = arith.cmpi eq, %arg1, %c0_i32 : i32
    %1 = arith.extui %0 : i1 to i32
    %c0_i32_0 = arith.constant 0 : i32
    %2 = arith.cmpi ne, %1, %c0_i32_0 : i32
    scf.if %2 {
      %cst_16 = arith.constant 0x7F800000 : f32
      %42 = vector.broadcast %cst_16 : f32 to vector<8x1xf32>
      %c0_17 = arith.constant 0 : index
      %c0_18 = arith.constant 0 : index
      %43 = vector.load %arg5[%c0_17, %c0_18] : memref<8x1xf32, #tpu.memory_space<vmem>>, vector<8x1xf32>
      tpu.vector_store %arg5[%c0_17, %c0_18], %42 {strides = array<i32>} : memref<8x1xf32, #tpu.memory_space<vmem>>, vector<8x1xf32>,
      %cst_19 = arith.constant 0x7F800000 : f32
      %44 = vector.broadcast %cst_19 : f32 to vector<8x1xf32>
      %c0_20 = arith.constant 0 : index
      %c0_21 = arith.constant 0 : index
      %45 = vector.load %arg6[%c0_20, %c0_21] : memref<8x1xf32, #tpu.memory_space<vmem>>, vector<8x1xf32>
      tpu.vector_store %arg6[%c0_20, %c0_21], %44 {strides = array<i32>} : memref<8x1xf32, #tpu.memory_space<vmem>>, vector<8x1xf32>,
    } else {
    }
    %c0 = arith.constant 0 : index
    %c0_1 = arith.constant 0 : index
    %3 = vector.load %arg2[%c0, %c0_1] : memref<8x32xf32, #tpu.memory_space<vmem>>, vector<8x32xf32>
    %c0_2 = arith.constant 0 : index
    %c0_3 = arith.constant 0 : index
    %4 = vector.load %arg3[%c0_2, %c0_3] : memref<128x32xf32, #tpu.memory_space<vmem>>, vector<128x32xf32>
    %5 = arith.mulf %3, %3 : vector<8x32xf32>
    %cst = arith.constant dense<0.000000e+00> : vector<8xf32>
    %6 = vector.multi_reduction <add>, %5, %cst [1] : vector<8x32xf32> to vector<8xf32>
    %7 = vector.shape_cast %6 : vector<8xf32> to vector<8x1xf32>
    %8 = arith.mulf %4, %4 : vector<128x32xf32>
    %cst_4 = arith.constant dense<0.000000e+00> : vector<128xf32>
    %9 = vector.multi_reduction <add>, %8, %cst_4 [1] : vector<128x32xf32> to vector<128xf32>
    %10 = vector.shape_cast %9 : vector<128xf32> to vector<1x128xf32>
    %cst_5 = arith.constant -2.000000e+00 : f32
    %11 = vector.broadcast %cst_5 : f32 to vector<8x32xf32>
    %12 = arith.mulf %3, %11 : vector<8x32xf32>
    %cst_6 = arith.constant dense<0.000000e+00> : vector<8x128xf32>
    %13 = tpu.matmul %12, %4, %cst_6 {dimension_numbers = #tpu.dot_dimension_numbers<[1], [1], [0], [0], [0, 0, 1, 0], [], []>} : vector<8x32xf32>, vector<128x32xf32>, vector<8x128xf32> -> vector<8x128xf32>
    %14 = vector.broadcast %7 : vector<8x1xf32> to vector<8x128xf32>
    %15 = vector.broadcast %10 : vector<1x128xf32> to vector<8x128xf32>
    %16 = arith.addf %14, %15 : vector<8x128xf32>
    %17 = arith.addf %16, %13 : vector<8x128xf32>
    %cst_7 = arith.constant 0.000000e+00 : f32
    %18 = vector.broadcast %cst_7 : f32 to vector<8x128xf32>
    %19 = arith.maximumf %17, %18 : vector<8x128xf32>
    %c1_i32 = arith.constant 1 : i32
    %20 = arith.cmpi slt, %arg1, %c1_i32 : i32
    %21 = tpu.iota {dimensions = array<i32: 1>} : vector<8x128xi32>
    %c1_i32_8 = arith.constant 1 : i32
    %22 = arith.subi %arg1, %c1_i32_8 : i32
    %23 = arith.select %20, %arg1, %22 : i32
    %c128_i32 = arith.constant 128 : i32
    %24 = arith.muli %23, %c128_i32 : i32
    %c16_i32 = arith.constant 16 : i32
    %c16_i32_9 = arith.constant 16 : i32
    %25 = arith.select %20, %c16_i32, %c16_i32_9 : i32
    %26 = vector.broadcast %24 : i32 to vector<8x128xi32>
    %27 = arith.addi %26, %21 : vector<8x128xi32>
    %28 = vector.broadcast %25 : i32 to vector<8x128xi32>
    %29 = arith.cmpi slt, %27, %28 : vector<8x128xi32>
    %cst_10 = arith.constant 0x7F800000 : f32
    %30 = vector.broadcast %cst_10 : f32 to vector<8x128xf32>
    %31 = arith.select %29, %19, %30 : vector<8x128xi1>, vector<8x128xf32>
    %cst_11 = arith.constant dense<0x7F800000> : vector<8xf32>
    %32 = vector.multi_reduction <minimumf>, %31, %cst_11 [1] : vector<8x128xf32> to vector<8xf32>
    %33 = vector.shape_cast %32 : vector<8xf32> to vector<8x1xf32>
    %34 = arith.extui %20 : i1 to i32
    %c0_i32_12 = arith.constant 0 : i32
    %35 = arith.cmpi ne, %34, %c0_i32_12 : i32
    scf.if %35 {
      %c0_16 = arith.constant 0 : index
      %c0_17 = arith.constant 0 : index
      %42 = vector.load %arg5[%c0_16, %c0_17] : memref<8x1xf32, #tpu.memory_space<vmem>>, vector<8x1xf32>
      %43 = arith.minimumf %42, %33 : vector<8x1xf32>
      %c0_18 = arith.constant 0 : index
      %c0_19 = arith.constant 0 : index
      %44 = vector.load %arg5[%c0_18, %c0_19] : memref<8x1xf32, #tpu.memory_space<vmem>>, vector<8x1xf32>
      tpu.vector_store %arg5[%c0_18, %c0_19], %43 {strides = array<i32>} : memref<8x1xf32, #tpu.memory_space<vmem>>, vector<8x1xf32>,
    } else {
    }
    %true = arith.constant true
    %36 = arith.xori %20, %true : i1
    %37 = arith.extui %36 : i1 to i32
    %c0_i32_13 = arith.constant 0 : i32
    %38 = arith.cmpi ne, %37, %c0_i32_13 : i32
    scf.if %38 {
      %c0_16 = arith.constant 0 : index
      %c0_17 = arith.constant 0 : index
      %42 = vector.load %arg6[%c0_16, %c0_17] : memref<8x1xf32, #tpu.memory_space<vmem>>, vector<8x1xf32>
      %43 = arith.minimumf %42, %33 : vector<8x1xf32>
      %c0_18 = arith.constant 0 : index
      %c0_19 = arith.constant 0 : index
      %44 = vector.load %arg6[%c0_18, %c0_19] : memref<8x1xf32, #tpu.memory_space<vmem>>, vector<8x1xf32>
      tpu.vector_store %arg6[%c0_18, %c0_19], %43 {strides = array<i32>} : memref<8x1xf32, #tpu.memory_space<vmem>>, vector<8x1xf32>,
    } else {
    }
    %c1_i32_14 = arith.constant 1 : i32
    %39 = arith.cmpi eq, %arg1, %c1_i32_14 : i32
    %40 = arith.extui %39 : i1 to i32
    %c0_i32_15 = arith.constant 0 : i32
    %41 = arith.cmpi ne, %40, %c0_i32_15 : i32
    scf.if %41 {
      %42 = tpu.iota {dimensions = array<i32: 0>} : vector<8x1xi32>
      %c8_i32 = arith.constant 8 : i32
      %43 = arith.muli %arg0, %c8_i32 : i32
      %44 = vector.broadcast %43 : i32 to vector<8x1xi32>
      %45 = arith.addi %42, %44 : vector<8x1xi32>
      %c8_i32_16 = arith.constant 8 : i32
      %46 = vector.broadcast %c8_i32_16 : i32 to vector<8x1xi32>
      %47 = arith.cmpi slt, %45, %46 : vector<8x1xi32>
      %c0_17 = arith.constant 0 : index
      %c0_18 = arith.constant 0 : index
      %48 = vector.load %arg5[%c0_17, %c0_18] : memref<8x1xf32, #tpu.memory_space<vmem>>, vector<8x1xf32>
      %cst_19 = arith.constant 0.000000e+00 : f32
      %49 = vector.broadcast %cst_19 : f32 to vector<8x1xf32>
      %50 = arith.select %47, %48, %49 : vector<8x1xi1>, vector<8x1xf32>
      %51 = vector.shape_cast %50 : vector<8x1xf32> to vector<1x8x1xf32>
      %cst_20 = arith.constant dense<0.000000e+00> : vector<1xf32>
      %52 = vector.multi_reduction <add>, %51, %cst_20 [1, 2] : vector<1x8x1xf32> to vector<1xf32>
      %53 = vector.shape_cast %52 : vector<1xf32> to vector<1x1x1xf32>
      %54 = vector.extract %53[0, 0, 0] : f32 from vector<1x1x1xf32>
      %c0_21 = arith.constant 0 : index
      %c0_22 = arith.constant 0 : index
      %55 = vector.load %arg6[%c0_21, %c0_22] : memref<8x1xf32, #tpu.memory_space<vmem>>, vector<8x1xf32>
      %cst_23 = arith.constant 0.000000e+00 : f32
      %56 = vector.broadcast %cst_23 : f32 to vector<8x1xf32>
      %57 = arith.select %47, %55, %56 : vector<8x1xi1>, vector<8x1xf32>
      %58 = vector.shape_cast %57 : vector<8x1xf32> to vector<1x8x1xf32>
      %cst_24 = arith.constant dense<0.000000e+00> : vector<1xf32>
      %59 = vector.multi_reduction <add>, %58, %cst_24 [1, 2] : vector<1x8x1xf32> to vector<1xf32>
      %60 = vector.shape_cast %59 : vector<1xf32> to vector<1x1x1xf32>
      %61 = vector.extract %60[0, 0, 0] : f32 from vector<1x1x1xf32>
      %62 = arith.subf %54, %61 : f32
      %63 = vector.broadcast %62 : f32 to vector<1x8x128xf32>
      %c0_25 = arith.constant 0 : index
      %c0_26 = arith.constant 0 : index
      %c0_27 = arith.constant 0 : index
      %64 = vector.load %arg4[%c0_25, %c0_26, %c0_27] : memref<1x8x128xf32, #tpu.memory_space<vmem>>, vector<1x8x128xf32>
      tpu.vector_store %arg4[%c0_25, %c0_26, %c0_27], %63 {strides = array<i32>} : memref<1x8x128xf32, #tpu.memory_space<vmem>>, vector<1x8x128xf32>,
    } else {
    }
    return
  }
  func.func @transform_0(%arg0: i32, %arg1: i32) -> (i32, i32) {
    %c0_i32 = arith.constant 0 : i32
    %c0_i32_0 = arith.constant 0 : i32
    return %arg0, %c0_i32 : i32, i32
  }
  func.func @transform_1(%arg0: i32, %arg1: i32) -> (i32, i32) {
    %c0_i32 = arith.constant 0 : i32
    %c0_i32_0 = arith.constant 0 : i32
    return %arg1, %c0_i32 : i32, i32
  }
  func.func @transform_2(%arg0: i32, %arg1: i32) -> (i32, i32, i32) {
    %c0_i32 = arith.constant 0 : i32
    %c0_i32_0 = arith.constant 0 : i32
    %c0_i32_1 = arith.constant 0 : i32
    return %arg0, %c0_i32, %c0_i32_0 : i32, i32, i32
  }
}

</mosaic_0001>

<llo_original>
// kernel: tpu_custom_call.1
$region0: #{tpu_custom_call.1}
  #allocation0 [shape = 'u32[]', space=smem, size = 0x4, offset = 0x4, fixed_abs, tag = 'smem constant byte address 0x4 - core index']
  #allocation1 [shape = 'u32[72,128]{1,0:T(1,128)}', space=vmem, size = 0x9000, scoped, tag = 'internal scratch']
  #allocation2 [shape = 'f32[8,1]{1,0:T(8,128)}', space=vmem, size = 0x1000, scoped, tag = 'scratch operand']
  #allocation3 [shape = 'f32[8,1]{1,0:T(8,128)}', space=vmem, size = 0x1000, scoped, tag = 'scratch operand']
  %s0 = inlined_call_operand.vmem [shape: f32[8,32], index: 0, kind: input, shape index: {}]
  %s1 = inlined_call_operand.vmem [shape: f32[256,32], index: 1, kind: input, shape index: {}]
  %s2 = inlined_call_operand.hbm [shape: f32[1,8,128], index: 2, kind: output, shape index: {}]
  %s3 = sld [smem:[#allocation0]]
  $region57: #{tpu_custom_call.1} parent=0
    _
  %s5 = ssub.s32 1, %s3
  %s6 = scalar_select 0, %s5, %s3
  $region1: #{tpu_custom_call.1} parent=0
    #allocation4 [shape = 'u8[4096]{0}', space=vmem, size = 0x1000, scoped, tag = 'output window, operand 0, single buffered']
    #allocation5 [shape = 's32[2]{0}', space=sflag, size = 0x8, scoped, tag = 'scoped memory for tpu_custom_call.1']
    %7 = vsyncpa [#allocation5], 0
    loop: start=0, step=1, limit=4
    $region2: #{tpu_custom_call.1} parent=1 // loop_pre_header
      _
    $region3: #{tpu_custom_call.1} parent=1 // loop_header
      %s9 = sphi 0, %s13
      %p10 = scmp.ge.s32.totalorder %s9, 4
      %s16 = sphi 0, %s28
      %s17 = sphi 0, %s24
      %s18 = sphi 0, %s16
      %s19 = sphi 0, %s17
      %s20 = sphi 0, %s18
      %s21 = sphi 0, %s19
      %s31 = sphi 0, %s33
      %s34 = sphi 0, %s31
      %s35 = sphi 0, %s34
      %s51 = sphi 0, %s35
      %s57 = sphi 0, %s59
      %s60 = sphi 0, %s57
      %s61 = sphi 0, %s60
      %s77 = sphi 0, %s61
      %s83 = sphi 0, %s85
      %s86 = sphi 0, %s83
      %s87 = sphi 0, %s86
      %s103 = sphi 0, %s87
    $region4: #{tpu_custom_call.1} parent=1 // loop_header_branch
      %12 = sbr.rel (%p10) target = $region8
    $region5: #{tpu_custom_call.1} parent=1 // loop_body
      %s14 = ssub.s32 %s9, 1
      %s15 = ssub.s32 %s9, 2
      %s22 = sadd.s32 1, %s17
      %p23 = scmp.ge.s32.totalorder %s22, 2
      %s24 = scalar_select %p23, 0, %s22
      %s25 = sadd.s32 1, %s16
      %s26 = scalar_select %p23, %s25, %s16
      %p27 = scmp.ge.s32.totalorder %s26, 1
      %s28 = scalar_select %p27, 0, %s26
      %s29 = ssub.s32 %s16, %s28
      %p30 = scmp.eq.s32.totalorder %s29, 0
      %s32 = sadd.s32 %s31, 1
      %s33 = scalar_select %p30, %s31, %s32
      %p36 = pneg %p30
      %p37 = scmp.eq.s32.totalorder %s9, 1
      %p38 = por %p36, %p37
      %p39 = scmp.ne.s32.totalorder %s31, %s34
      %p40 = scmp.eq.s32.totalorder %s9, 0
      %p41 = por %p39, %p40
      %p42 = scmp.ne.s32.totalorder %s31, %s34
      %p43 = scmp.eq.s32.totalorder %s14, 1
      %p44 = por %p42, %p43
      %p45 = scmp.ne.s32.totalorder %s34, %s35
      %p46 = scmp.eq.s32.totalorder %s14, 0
      %p47 = por %p45, %p46
      %p48 = scmp.ne.s32.totalorder %s34, %s35
      %p49 = scmp.eq.s32.totalorder %s15, 1
      %p50 = por %p48, %p49
      %p52 = scmp.ne.s32.totalorder %s35, %s51
      %p53 = scmp.eq.s32.totalorder %s15, 0
      %p54 = por %p52, %p53
      %s55 = ssub.s32 %s17, %s24
      %p56 = scmp.eq.s32.totalorder %s55, 0
      %s58 = sadd.s32 %s57, 1
      %s59 = scalar_select %p56, %s57, %s58
      %p62 = pneg %p56
      %p63 = scmp.eq.s32.totalorder %s9, 1
      %p64 = por %p62, %p63
      %p65 = scmp.ne.s32.totalorder %s57, %s60
      %p66 = scmp.eq.s32.totalorder %s9, 0
      %p67 = por %p65, %p66
      %p68 = scmp.ne.s32.totalorder %s57, %s60
      %p69 = scmp.eq.s32.totalorder %s14, 1
      %p70 = por %p68, %p69
      %p71 = scmp.ne.s32.totalorder %s60, %s61
      %p72 = scmp.eq.s32.totalorder %s14, 0
      %p73 = por %p71, %p72
      %p74 = scmp.ne.s32.totalorder %s60, %s61
      %p75 = scmp.eq.s32.totalorder %s15, 1
      %p76 = por %p74, %p75
      %p78 = scmp.ne.s32.totalorder %s61, %s77
      %p79 = scmp.eq.s32.totalorder %s15, 0
      %p80 = por %p78, %p79
      %s81 = ssub.s32 %s16, %s28
      %p82 = scmp.eq.s32.totalorder %s81, 0
      %s84 = sadd.s32 %s83, 1
      %s85 = scalar_select %p82, %s83, %s84
      %p88 = pneg %p82
      %p89 = scmp.eq.s32.totalorder %s9, 1
      %p90 = por %p88, %p89
      %p91 = scmp.ne.s32.totalorder %s83, %s86
      %p92 = scmp.eq.s32.totalorder %s9, 0
      %p93 = por %p91, %p92
      %p94 = scmp.ne.s32.totalorder %s83, %s86
      %p95 = scmp.eq.s32.totalorder %s14, 1
      %p96 = por %p94, %p95
      %p97 = scmp.ne.s32.totalorder %s86, %s87
      %p98 = scmp.eq.s32.totalorder %s14, 0
      %p99 = por %p97, %p98
      %p100 = scmp.ne.s32.totalorder %s86, %s87
      %p101 = scmp.eq.s32.totalorder %s15, 1
      %p102 = por %p100, %p101
      %p104 = scmp.ne.s32.totalorder %s87, %s103
      %p105 = scmp.eq.s32.totalorder %s15, 0
      %p106 = por %p104, %p105
      %p107 = scmp.le.s32.totalorder 1, %s9
      %p108 = scmp.lt.s32.totalorder %s9, 3
      %p109 = pnand %p107, %p108
      %p110 = pneg %p109
      // Predicated region
      $region9: #{tpu_custom_call.1} parent=5 // pred_check
        _
      $region10: #{tpu_custom_call.1} parent=5 // pred_check_branch
        %112 = sbr.rel (%p109) target = $region12
      $region11: #{tpu_custom_call.1} parent=5 // pred_region
        %s113 = ssub.s32 %s9, 1
        // Predicated region
        $region13: #{tpu_custom_call.1} parent=11 // pred_check
          %p114 = pneg %p47
        $region14: #{tpu_custom_call.1} parent=11 // pred_check_branch
          %116 = sbr.rel (%p114) target = $region16
        $region15: #{tpu_custom_call.1} parent=11 // pred_region
          %p117 = scmp.lt.s32.totalorder %s18, 0
          %s118 = scalar_select %p117, %s18, 0
          %s119 = smul.addr %s118, 8
          %s120 = scalar_lea.vmem %s0, %s119
        $region16: #{tpu_custom_call.1} parent=11 // pred_fallthru
          _
      $region12: #{tpu_custom_call.1} parent=5 // pred_fallthru
        _
      %p121 = scmp.lt.s32.totalorder %s9, 2
      // Predicated region
      $region17: #{tpu_custom_call.1} parent=5 // pred_check
        %p122 = pneg %p121
      $region18: #{tpu_custom_call.1} parent=5 // pred_check_branch
        %124 = sbr.rel (%p122) target = $region20
      $region19: #{tpu_custom_call.1} parent=5 // pred_region
        // Predicated region
        $region21: #{tpu_custom_call.1} parent=19 // pred_check
          %p125 = pneg %p67
        $region22: #{tpu_custom_call.1} parent=19 // pred_check_branch
          %127 = sbr.rel (%p125) target = $region24
        $region23: #{tpu_custom_call.1} parent=19 // pred_region
          %s128 = smul.u32 16, %s17
          %p129 = scmp.lt.s32.totalorder %s128, 31
          %s130 = scalar_select %p129, %s128, 31
          %s131 = smul.addr %s130, 8
          %s132 = scalar_lea.vmem %s1, %s131
          %s133 = smul.u32 16, %s17
        $region24: #{tpu_custom_call.1} parent=19 // pred_fallthru
          _
      $region20: #{tpu_custom_call.1} parent=5 // pred_fallthru
        _
      %p134 = scmp.le.s32.totalorder 1, %s9
      %p135 = scmp.lt.s32.totalorder %s9, 3
      %p136 = pnand %p134, %p135
      %p137 = pneg %p136
      // Predicated region
      $region25: #{tpu_custom_call.1} parent=5 // pred_check
        _
      $region26: #{tpu_custom_call.1} parent=5 // pred_check_branch
        %139 = sbr.rel (%p136) target = $region28
      $region27: #{tpu_custom_call.1} parent=5 // pred_region
        %s140 = ssub.s32 %s9, 1
        %p141 = scmp.lt.s32.totalorder %s18, 0
        %s142 = scalar_select %p141, %s18, 0
        %s143 = smul.addr %s142, 8
        %s144 = scalar_lea.vmem %s0, %s143
        %p145 = pneg %p47
        %p146 = pneg %p44
        %s147 = smul.u32 16, %s19
        %p148 = scmp.lt.s32.totalorder %s147, 31
        %s149 = scalar_select %p148, %s147, 31
        %s150 = smul.addr %s149, 8
        %s151 = scalar_lea.vmem %s1, %s150
        %p152 = pneg %p73
        %p153 = pneg %p70
        %p154 = pneg %p99
        %p155 = pneg %p96
        %p156 = scmp.lt.s32.totalorder %s18, 0
        %s157 = scalar_select %p156, %s18, 0
        %s158 = smul.addr %s157, 8
        %s159 = scalar_lea.vmem %s0, %s158
        %s160 = smul.u32 16, %s19
        %p161 = scmp.lt.s32.totalorder %s160, 31
        %s162 = scalar_select %p161, %s160, 31
        %s163 = smul.addr %s162, 8
        %s164 = scalar_lea.vmem %s1, %s163
        %s165 = smul.u32 16, %s19
        %p166 = scmp.eq.s32.totalorder %s19, 0
        // Predicated region
        $region29: #{tpu_custom_call.1} parent=27 // pred_check
          %p167 = pneg %p166
        $region30: #{tpu_custom_call.1} parent=27 // pred_check_branch
          %169 = sbr.rel (%p167) target = $region32
        $region31: #{tpu_custom_call.1} parent=27 // pred_region
          %vm170 = vcmask 7168
          %171 = vst.msk [vmem:[#allocation2] sm:$0xff] %vm170, inf
          %172 = vst.msk [vmem:[#allocation3] sm:$0xff] %vm170, inf
        $region32: #{tpu_custom_call.1} parent=27 // pred_fallthru
          _
        %v173 = vld [vmem:[%s159] sm:$0xff]
        %v174 = vld [vmem:[%s164] sm:$0xff]
        %v175 = vld [vmem:[%s164 + $0x8] sm:$0xff]
        %v176 = vld [vmem:[%s164 + $0x10] sm:$0xff]
        %v177 = vld [vmem:[%s164 + $0x18] sm:$0xff]
        %v178 = vld [vmem:[%s164 + $0x20] sm:$0xff]
        %v179 = vld [vmem:[%s164 + $0x28] sm:$0xff]
        %v180 = vld [vmem:[%s164 + $0x30] sm:$0xff]
        %v181 = vld [vmem:[%s164 + $0x38] sm:$0xff]
        %v182 = vld [vmem:[%s164 + $0x40] sm:$0xff]
        %v183 = vld [vmem:[%s164 + $0x48] sm:$0xff]
        %v184 = vld [vmem:[%s164 + $0x50] sm:$0xff]
        %v185 = vld [vmem:[%s164 + $0x58] sm:$0xff]
        %v186 = vld [vmem:[%s164 + $0x60] sm:$0xff]
        %v187 = vld [vmem:[%s164 + $0x68] sm:$0xff]
        %v188 = vld [vmem:[%s164 + $0x70] sm:$0xff]
        %v189 = vld [vmem:[%s164 + $0x78] sm:$0xff]
        %v190 = vmul.f32 %v173, %v173
        %vm191 = vcmask 261120
        %v192 = vsel %vm191, %v190, 0.0
        %193 = vadd.xlane.f32.xlu0 %v192
        %v194 = vpop.xlane.xlu0 %193
        %v195 = vmul.f32 %v174, %v174
        %v196 = vmul.f32 %v175, %v175
        %v197 = vmul.f32 %v176, %v176
        %v198 = vmul.f32 %v177, %v177
        %v199 = vmul.f32 %v178, %v178
        %v200 = vmul.f32 %v179, %v179
        %v201 = vmul.f32 %v180, %v180
        %v202 = vmul.f32 %v181, %v181
        %v203 = vmul.f32 %v182, %v182
        %v204 = vmul.f32 %v183, %v183
        %v205 = vmul.f32 %v184, %v184
        %v206 = vmul.f32 %v185, %v185
        %v207 = vmul.f32 %v186, %v186
        %v208 = vmul.f32 %v187, %v187
        %v209 = vmul.f32 %v188, %v188
        %v210 = vmul.f32 %v189, %v189
        %v211 = vsel %vm191, %v195, 0.0
        %212 = vadd.xlane.f32.xlu0 %v211
        %v213 = vpop.xlane.xlu0 %212
        %v214 = vsel %vm191, %v196, 0.0
        %215 = vadd.xlane.f32.xlu0 %v214
        %v216 = vpop.xlane.xlu0 %215
        %v217 = vsel %vm191, %v197, 0.0
        %218 = vadd.xlane.f32.xlu0 %v217
        %v219 = vpop.xlane.xlu0 %218
        %v220 = vsel %vm191, %v198, 0.0
        %221 = vadd.xlane.f32.xlu0 %v220
        %v222 = vpop.xlane.xlu0 %221
        %v223 = vsel %vm191, %v199, 0.0
        %224 = vadd.xlane.f32.xlu0 %v223
        %v225 = vpop.xlane.xlu0 %224
        %v226 = vsel %vm191, %v200, 0.0
        %227 = vadd.xlane.f32.xlu0 %v226
        %v228 = vpop.xlane.xlu0 %227
        %v229 = vsel %vm191, %v201, 0.0
        %230 = vadd.xlane.f32.xlu0 %v229
        %v231 = vpop.xlane.xlu0 %230
        %v232 = vsel %vm191, %v202, 0.0
        %233 = vadd.xlane.f32.xlu0 %v232
        %v234 = vpop.xlane.xlu0 %233
        %v235 = vsel %vm191, %v203, 0.0
        %236 = vadd.xlane.f32.xlu0 %v235
        %v237 = vpop.xlane.xlu0 %236
        %v238 = vsel %vm191, %v204, 0.0
        %239 = vadd.xlane.f32.xlu0 %v238
        %v240 = vpop.xlane.xlu0 %239
        %v241 = vsel %vm191, %v205, 0.0
        %242 = vadd.xlane.f32.xlu0 %v241
        %v243 = vpop.xlane.xlu0 %242
        %v244 = vsel %vm191, %v206, 0.0
        %245 = vadd.xlane.f32.xlu0 %v244
        %v246 = vpop.xlane.xlu0 %245
        %v247 = vsel %vm191, %v207, 0.0
        %248 = vadd.xlane.f32.xlu0 %v247
        %v249 = vpop.xlane.xlu0 %248
        %v250 = vsel %vm191, %v208, 0.0
        %251 = vadd.xlane.f32.xlu0 %v250
        %v252 = vpop.xlane.xlu0 %251
        %v253 = vsel %vm191, %v209, 0.0
        %254 = vadd.xlane.f32.xlu0 %v253
        %v255 = vpop.xlane.xlu0 %254
        %v256 = vsel %vm191, %v210, 0.0
        %257 = vadd.xlane.f32.xlu0 %v256
        %v258 = vpop.xlane.xlu0 %257
        %v259 = vmul.f32 %v173, -2.0
        %v261 = vsel %vm191, %v259, 0
        %v264 = vsel %vm191, %v174, 0
        %v267 = vsel %vm191, %v175, 0
        %v270 = vsel %vm191, %v176, 0
        %v273 = vsel %vm191, %v177, 0
        %v276 = vsel %vm191, %v178, 0
        %v279 = vsel %vm191, %v179, 0
        %v282 = vsel %vm191, %v180, 0
        %v285 = vsel %vm191, %v181, 0
        %v288 = vsel %vm191, %v182, 0
        %v291 = vsel %vm191, %v183, 0
        %v294 = vsel %vm191, %v184, 0
        %v297 = vsel %vm191, %v185, 0
        %v300 = vsel %vm191, %v186, 0
        %v303 = vsel %vm191, %v187, 0
        %v306 = vsel %vm191, %v188, 0
        %v309 = vsel %vm191, %v189, 0
        %311 = vmatpush.xpose.msra.mxu0 %v309
        %312 = vmatpush.xpose.msra.mxu0 %v306
        %313 = vmatpush.xpose.msra.mxu0 %v303
        %314 = vmatpush.xpose.msra.mxu0 %v300
        %315 = vmatpush.xpose.msra.mxu0 %v297
        %316 = vmatpush.xpose.msra.mxu0 %v294
        %317 = vmatpush.xpose.msra.mxu0 %v291
        %318 = vmatpush.xpose.msra.mxu0 %v288
        %319 = vmatpush.xpose.msra.mxu0 %v285
        %320 = vmatpush.xpose.msra.mxu0 %v282
        %321 = vmatpush.xpose.msra.mxu0 %v279
        %322 = vmatpush.xpose.msra.mxu0 %v276
        %323 = vmatpush.xpose.msra.mxu0 %v273
        %324 = vmatpush.xpose.msra.mxu0 %v270
        %325 = vmatpush.xpose.msra.mxu0 %v267
        %326 = vmatpush.xpose.msra.mxu0 %v264
        %327 = vmatmul.f32.gmra.mxu0 %v261
        %v328 = vpop.f32.mrf.mxu0
        %v329 = vadd.f32 0.0, %v328
        %330 = vdwg.mxu0
        %v347 = vlaneseq
        %v348 = vand.u32 %v347, 127
        %v349 = vperm.slane %v213, %v348
        %v350 = vadd.s32 %v348, 4294967288
        %v351 = vperm.slane %v216, %v350
        %vm352 = vcmask 130112
        %v353 = vsel %vm352, %v351, %v349
        %v354 = vadd.s32 %v348, 4294967280
        %v355 = vperm.slane %v219, %v354
        %vm356 = vcmask 195712
        %v357 = vsel %vm356, %v355, %v353
        %v358 = vadd.s32 %v348, 4294967272
        %v359 = vperm.slane %v222, %v358
        %vm360 = vcmask 261312
        %v361 = vsel %vm360, %v359, %v357
        %v362 = vadd.s32 %v348, 4294967264
        %v363 = vperm.slane %v225, %v362
        %vm364 = vcmask 326912
        %v365 = vsel %vm364, %v363, %v361
        %v366 = vadd.s32 %v348, 4294967256
        %v367 = vperm.slane %v228, %v366
        %vm368 = vcmask 392512
        %v369 = vsel %vm368, %v367, %v365
        %v370 = vadd.s32 %v348, 4294967248
        %v371 = vperm.slane %v231, %v370
        %vm372 = vcmask 458112
        %v373 = vsel %vm372, %v371, %v369
        %v374 = vadd.s32 %v348, 4294967240
        %v375 = vperm.slane %v234, %v374
        %vm376 = vcmask 523712
        %v377 = vsel %vm376, %v375, %v373
        %v378 = vadd.s32 %v348, 4294967232
        %v379 = vperm.slane %v237, %v378
        %vm380 = vcmask 589312
        %v381 = vsel %vm380, %v379, %v377
        %v382 = vadd.s32 %v348, 4294967224
        %v383 = vperm.slane %v240, %v382
        %vm384 = vcmask 654912
        %v385 = vsel %vm384, %v383, %v381
        %v386 = vadd.s32 %v348, 4294967216
        %v387 = vperm.slane %v243, %v386
        %vm388 = vcmask 720512
        %v389 = vsel %vm388, %v387, %v385
        %v390 = vadd.s32 %v348, 4294967208
        %v391 = vperm.slane %v246, %v390
        %vm392 = vcmask 786112
        %v393 = vsel %vm392, %v391, %v389
        %v394 = vadd.s32 %v348, 4294967200
        %v395 = vperm.slane %v249, %v394
        %vm396 = vcmask 851712
        %v397 = vsel %vm396, %v395, %v393
        %v398 = vadd.s32 %v348, 4294967192
        %v399 = vperm.slane %v252, %v398
        %vm400 = vcmask 917312
        %v401 = vsel %vm400, %v399, %v397
        %v402 = vadd.s32 %v348, 4294967184
        %v403 = vperm.slane %v255, %v402
        %vm404 = vcmask 982912
        %v405 = vsel %vm404, %v403, %v401
        %v406 = vadd.s32 %v348, 4294967176
        %v407 = vperm.slane %v258, %v406
        %vm408 = vcmask 1048512
        %v409 = vsel %vm408, %v407, %v405
        %vm410 = vcmask 1042434
        %v411 = vsel %vm410, %v409, %v409
        %vm412 = vcmask 1043459
        %v413 = vsel %vm412, %v409, %v411
        %vm414 = vcmask 1044484
        %v415 = vsel %vm414, %v409, %v413
        %vm416 = vcmask 1045509
        %v417 = vsel %vm416, %v409, %v415
        %vm418 = vcmask 1046534
        %v419 = vsel %vm418, %v409, %v417
        %vm420 = vcmask 1047559
        %v421 = vsel %vm420, %v409, %v419
        %v423 = vadd.f32 %v194, %v421
        %v424 = vadd.f32 %v423, %v329
        %v425 = vmax.f32 %v424, 0.0
        %p426 = scmp.lt.s32.totalorder %s19, 1
        %s427 = ssub.s32 %s19, 1
        %s428 = scalar_select %p426, %s19, %s427
        %s429 = smul.u32 %s428, 128
        %v430 = vstv %s429
        %v431 = vadd.s32 %v430, %v348
        %vm432 = vcmp.lt.s32.totalorder %v431, 16
        %v433 = vsel %vm432, %v425, inf
        %434 = vmin.xlane.f32.xlu0 %v433
        %v435 = vpop.xlane.xlu0 %434
        // Predicated region
        $region33: #{tpu_custom_call.1} parent=27 // pred_check
          %p436 = pneg %p426
        $region34: #{tpu_custom_call.1} parent=27 // pred_check_branch
          %438 = sbr.rel (%p436) target = $region36
        $region35: #{tpu_custom_call.1} parent=27 // pred_region
          %v439 = vld [vmem:[#allocation2] sm:$0xff]
          %v440 = vmin.f32 %v439, %v435
          %vm441 = vcmask 7168
          %442 = vst.msk [vmem:[#allocation2] sm:$0xff] %vm441, %v440
        $region36: #{tpu_custom_call.1} parent=27 // pred_fallthru
          _
        %p443 = scmp.ge.s32.totalorder %s19, 1
        // Predicated region
        $region37: #{tpu_custom_call.1} parent=27 // pred_check
          %p444 = pneg %p443
        $region38: #{tpu_custom_call.1} parent=27 // pred_check_branch
          %446 = sbr.rel (%p444) target = $region40
        $region39: #{tpu_custom_call.1} parent=27 // pred_region
          %v447 = vld [vmem:[#allocation3] sm:$0xff]
          %v448 = vmin.f32 %v447, %v435
          %vm449 = vcmask 7168
          %450 = vst.msk [vmem:[#allocation3] sm:$0xff] %vm449, %v448
        $region40: #{tpu_custom_call.1} parent=27 // pred_fallthru
          _
        %p451 = scmp.eq.s32.totalorder %s19, 1
        // Predicated region
        $region41: #{tpu_custom_call.1} parent=27 // pred_check
          %p452 = pneg %p451
        $region42: #{tpu_custom_call.1} parent=27 // pred_check_branch
          %454 = sbr.rel (%p452) target = $region44
        $region43: #{tpu_custom_call.1} parent=27 // pred_region
          %v455 = vlaneseq
          %v456 = vshrl.u32 %v455, 7
          %s457 = smul.u32 %s18, 8
          %v458 = vstv %s457
          %v459 = vadd.s32 %v456, %v458
          %vm460 = vcmp.lt.s32.totalorder %v459, 8
          %v461 = vld [vmem:[#allocation2] sm:$0xff]
          %v462 = vsel %vm460, %v461, 0.0
          %vm463 = vcmask 7168
          %v464 = vsel %vm463, %v462, 0.0
          %465 = vadd.xlane.f32.xlu0 %v464
          %v466 = vpop.xlane.xlu0 %465
          %v467 = vrot.slane %v466, 4
          %v468 = vadd.f32 %v466, %v467
          %v469 = vrot.slane %v468, 2
          %v470 = vadd.f32 %v468, %v469
          %v471 = vrot.slane %v470, 1
          %v472 = vadd.f32 %v470, %v471
          %s473 = vtos %v472
          %v474 = vld [vmem:[#allocation3] sm:$0xff]
          %v475 = vsel %vm460, %v474, 0.0
          %v476 = vsel %vm463, %v475, 0.0
          %477 = vadd.xlane.f32.xlu0 %v476
          %v478 = vpop.xlane.xlu0 %477
          %v479 = vrot.slane %v478, 4
          %v480 = vadd.f32 %v478, %v479
          %v481 = vrot.slane %v480, 2
          %v482 = vadd.f32 %v480, %v481
          %v483 = vrot.slane %v482, 1
          %v484 = vadd.f32 %v482, %v483
          %s485 = vtos %v484
          %s486 = ssub.f32 %s473, %s485
          %v487 = vstv %s486
          %488 = vst [vmem:[#allocation4] sm:$0xff] %v487
        $region44: #{tpu_custom_call.1} parent=27 // pred_fallthru
          _
        // Predicated region
        $region45: #{tpu_custom_call.1} parent=27 // pred_check
          %p489 = pneg %p96
        $region46: #{tpu_custom_call.1} parent=27 // pred_check_branch
          %491 = sbr.rel (%p489) target = $region48
        $region47: #{tpu_custom_call.1} parent=27 // pred_region
          %493 = vsyncadd [#allocation5], 0
          %s494 = smul.addr %s18, 8
          %s495 = scalar_lea.hbm %s2, %s494
          %s497 = sshll.u32 [#allocation4], 4
          %s498 = int_to_ptr.vmem [resolvable:$true] %s497
          %s499 = sshll.u32 %s495, 4
          %s500 = int_to_ptr.hbm [resolvable:$true] %s499
          %502 = dma.vmem_to_hbm [thread:$0]  %s498, 128, %s500, [#allocation5]
        $region48: #{tpu_custom_call.1} parent=27 // pred_fallthru
          _
        // Predicated region
        $region49: #{tpu_custom_call.1} parent=27 // pred_check
          %p503 = pneg %p96
        $region50: #{tpu_custom_call.1} parent=27 // pred_check_branch
          %505 = sbr.rel (%p503) target = $region52
        $region51: #{tpu_custom_call.1} parent=27 // pred_region
          %507 = dma.done [#allocation5], 128
        $region52: #{tpu_custom_call.1} parent=27 // pred_fallthru
          _
      $region28: #{tpu_custom_call.1} parent=5 // pred_fallthru
        _
      %p508 = scmp.le.s32.totalorder 2, %s9
      // Predicated region
      $region53: #{tpu_custom_call.1} parent=5 // pred_check
        %p509 = pneg %p508
      $region54: #{tpu_custom_call.1} parent=5 // pred_check_branch
        %511 = sbr.rel (%p509) target = $region56
      $region55: #{tpu_custom_call.1} parent=5 // pred_region
        %s512 = ssub.s32 %s9, 2
      $region56: #{tpu_custom_call.1} parent=5 // pred_fallthru
        _
    $region6: #{tpu_custom_call.1} parent=1 // loop_footer
      %s13 = sadd.s32 1, %s9
    $region7: #{tpu_custom_call.1} parent=1 // loop_footer_branch
      %8 = sbr.rel target = $region3
    $region8: #{tpu_custom_call.1} parent=1 // loop_exit
      _
    %513 = vsyncpa [#allocation5], 1
    %s514 = scalar_lea.sflag [#allocation5], 1
    %515 = vsyncpa %s514, 1

</llo_original>
